<compile_context>
chip_gen: v5e
topology: v5e:2x2
jax: 0.10.0
libtpu: 0.0.40
codegen_flags: <defaults>
</compile_context>

<pallas_src>
import functools

import jax
import jax.numpy as jnp
from jax.experimental import pallas as pl
from jax.experimental.pallas import tpu as pltpu

EPS = 1e-5
OUT_PAD = 128   # lane-dense padding of the final 512 -> 1 projection


def _round_up(n, m):
    return ((n + m - 1) // m) * m


def fold_bn_into_linear(w, b, gamma, beta, mean, var, eps=EPS):
    """Fold y = BN(x @ w + b) into y = x @ w' + b' (all math in f32)."""
    scale = gamma * jax.lax.rsqrt(var + eps)           # (1, F)
    w_f = w * scale                                    # broadcast over rows
    b_f = (b - mean) * scale + beta
    return w_f, b_f


def mlp_kernel(x_ref, w1_ref, b1_ref, w2_ref, b2_ref, w3_ref, o_ref):
    # Dropout(p=0.5) layers are identity in eval mode.
    # Linear(6 -> 512) with BatchNorm1d folded into (w1, b1); bf16 MXU matmul,
    # f32 accumulation, f32 epilogue.
    x = x_ref[...].astype(w1_ref.dtype)
    h = jnp.dot(x, w1_ref[...], preferred_element_type=jnp.float32) + b1_ref[...]
    h = jnp.maximum(h, 0.0)

    # Linear(512 -> 512) with BatchNorm1d folded in, then ReLU.
    h = jnp.dot(h.astype(w2_ref.dtype), w2_ref[...],
                preferred_element_type=jnp.float32) + b2_ref[...]
    h = jnp.maximum(h, 0.0)

    # Linear(512 -> 1), zero-padded to 128 output lanes for lane-dense stores.
    # (columns 1..127 of w3 are zero; final bias b3 is added in the wrapper)
    o_ref[...] = jnp.dot(h.astype(w3_ref.dtype), w3_ref[...],
                         preferred_element_type=jnp.float32)


@functools.partial(jax.jit, static_argnames=("tb", "weight_dtype"))
def neural_network_forward(x, params, *, tb=256, weight_dtype=jnp.bfloat16):
    """x: [B, 6] float32 -> logits [B, 1] float32 (eval-mode forward)."""
    B, F_in = x.shape

    # --- host-side (traced, but outside the kernel) parameter preparation ---
    w1f, b1f = fold_bn_into_linear(params["w1"], params["b1"], params["g1"],
                                   params["beta1"], params["m1"], params["v1"])
    w2f, b2f = fold_bn_into_linear(params["w2"], params["b2"], params["g2"],
                                   params["beta2"], params["m2"], params["v2"])
    w3p = jnp.pad(params["w3"], ((0, 0), (0, OUT_PAD - params["w3"].shape[1])))

    w1f = w1f.astype(weight_dtype)
    w2f = w2f.astype(weight_dtype)
    w3p = w3p.astype(weight_dtype)
    b1f = b1f.astype(jnp.float32)
    b2f = b2f.astype(jnp.float32)

    # --- batch tiling: TB a multiple of 8 (multiple of 256 for large batch) ---
    TB = tb if B >= tb else _round_up(B, 8)
    Bp = _round_up(B, TB)
    xp = x if Bp == B else jnp.pad(x, ((0, Bp - B), (0, 0)))

    out = pl.pallas_call(
        mlp_kernel,
        out_shape=jax.ShapeDtypeStruct((Bp, OUT_PAD), jnp.float32),
        grid=(pl.cdiv(Bp, TB),),
        in_specs=[
            pl.BlockSpec((TB, F_in), lambda i: (i, 0)),          # x: tiled rows
            pl.BlockSpec(w1f.shape, lambda i: (0, 0)),           # weights stay
            pl.BlockSpec(b1f.shape, lambda i: (0, 0)),           # VMEM-resident
            pl.BlockSpec(w2f.shape, lambda i: (0, 0)),
            pl.BlockSpec(b2f.shape, lambda i: (0, 0)),
            pl.BlockSpec(w3p.shape, lambda i: (0, 0)),
        ],
        out_specs=pl.BlockSpec((TB, OUT_PAD), lambda i: (i, 0)),
        compiler_params=pltpu.CompilerParams(
            dimension_semantics=("parallel",)),
    )(xp, w1f, b1f, w2f, b2f, w3p)

    # Slice lane 0 of the padded output and add the final (1,1) bias.
    return out[:B, :1] + params["b3"]


def init_params(key):
    """Deterministic synthetic parameters matching the PyTorch module shapes."""
    ks = jax.random.split(key, 10)

    def linear(kw, kb, fan_in, fan_out):
        bound = 1.0 / jnp.sqrt(fan_in)
        w = jax.random.uniform(kw, (fan_in, fan_out), jnp.float32, -bound, bound)
        b = jax.random.uniform(kb, (1, fan_out), jnp.float32, -bound, bound)
        return w, b

    w1, b1 = linear(ks[0], ks[1], 6, 512)
    w2, b2 = linear(ks[2], ks[3], 512, 512)
    w3, b3 = linear(ks[4], ks[5], 512, 1)

    # BatchNorm1d affine params (gamma=1, beta=0) and synthetic running stats
    # (independent keys for mean and var).
    g1 = jnp.ones((1, 512), jnp.float32)
    beta1 = jnp.zeros((1, 512), jnp.float32)
    m1 = 0.1 * jax.random.normal(ks[6], (1, 512), jnp.float32)
    v1 = 1.0 + 0.05 * jax.random.uniform(ks[7], (1, 512), jnp.float32)

    g2 = jnp.ones((1, 512), jnp.float32)
    beta2 = jnp.zeros((1, 512), jnp.float32)
    m2 = 0.1 * jax.random.normal(ks[8], (1, 512), jnp.float32)
    v2 = 1.0 + 0.05 * jax.random.uniform(ks[9], (1, 512), jnp.float32)

    return dict(
        w1=w1, b1=b1, g1=g1, beta1=beta1, m1=m1, v1=v1,
        w2=w2, b2=b2, g2=g2, beta2=beta2, m2=m2, v2=v2,
        w3=w3, b3=b3,
    )


def reference_forward_f32(x, p):
    """Pure-f32 JAX reference of the original (unfolded) eval-mode forward."""
    h = x @ p["w1"] + p["b1"]
    h = (h - p["m1"]) / jnp.sqrt(p["v1"] + EPS) * p["g1"] + p["beta1"]
    h = jnp.maximum(h, 0.0)
    h = h @ p["w2"] + p["b2"]
    h = (h - p["m2"]) / jnp.sqrt(p["v2"] + EPS) * p["g2"] + p["beta2"]
    h = jnp.maximum(h, 0.0)
    return h @ p["w3"] + p["b3"]


def reference_forward_matched(x, p, weight_dtype=jnp.bfloat16):
    """JAX reference using the same BN-folding + bf16 quantization as the kernel."""
    w1f, b1f = fold_bn_into_linear(p["w1"], p["b1"], p["g1"], p["beta1"], p["m1"], p["v1"])
    w2f, b2f = fold_bn_into_linear(p["w2"], p["b2"], p["g2"], p["beta2"], p["m2"], p["v2"])

    def mm(a, w):
        return jnp.dot(a.astype(weight_dtype), w.astype(weight_dtype),
                       preferred_element_type=jnp.float32)

    h = jnp.maximum(mm(x, w1f) + b1f, 0.0)
    h = jnp.maximum(mm(h, w2f) + b2f, 0.0)
    return mm(h, p["w3"]) + p["b3"]


if __name__ == "__main__":
    key = jax.random.PRNGKey(0)
    kx, kp = jax.random.split(key)

    B = 8
    x = jax.random.normal(kx, (B, 6), jnp.float32)
    params = init_params(kp)

    out = neural_network_forward(x, params)
    out = jax.block_until_ready(out)
    assert out.shape == (B, 1)

    # Exact-semantics check against a JAX reference with identical
    # BN-folding / bf16 weight quantization.
    ref_matched = reference_forward_matched(x, params)
    assert jnp.allclose(out, ref_matched, atol=1e-3, rtol=1e-3), \
        "mismatch vs quantization-matched reference"

    # Looser check against the original full-f32 (unfolded) forward pass:
    # only bf16 weight rounding separates the two.
    ref_f32 = reference_forward_f32(x, params)
    assert jnp.allclose(out, ref_f32, atol=3e-2, rtol=3e-2), \
        "mismatch vs f32 reference"

    print("KERNEL_OK")
</pallas_src>

<mosaic_0001>
module attributes {stable_mosaic.version = 11 : i64} {
  func.func @mlp_kernel(%arg0: i32, %arg1: memref<8x6xf32, #tpu.memory_space<vmem>>, %arg2: memref<6x512xbf16, #tpu.memory_space<vmem>>, %arg3: memref<1x512xf32, #tpu.memory_space<vmem>>, %arg4: memref<512x512xbf16, #tpu.memory_space<vmem>>, %arg5: memref<1x512xf32, #tpu.memory_space<vmem>>, %arg6: memref<512x128xbf16, #tpu.memory_space<vmem>>, %arg7: memref<8x128xf32, #tpu.memory_space<vmem>>) attributes {dimension_semantics = [#tpu.dimension_semantics<parallel>], iteration_bounds = array<i64: 1>, scalar_prefetch = 0 : i64, scratch_operands = 0 : i64, tpu.core_type = #tpu.core_type<tc>, window_params = [{transform_indices = @transform_0, window_bounds = array<i64: 8, 6>}, {pipeline_mode = #tpu.pipeline_mode<synchronous>, transform_indices = @transform_1, window_bounds = array<i64: 6, 512>}, {pipeline_mode = #tpu.pipeline_mode<synchronous>, transform_indices = @transform_2, window_bounds = array<i64: 1, 512>}, {pipeline_mode = #tpu.pipeline_mode<synchronous>, transform_indices = @transform_3, window_bounds = array<i64: 512, 512>}, {pipeline_mode = #tpu.pipeline_mode<synchronous>, transform_indices = @transform_4, window_bounds = array<i64: 1, 512>}, {pipeline_mode = #tpu.pipeline_mode<synchronous>, transform_indices = @transform_5, window_bounds = array<i64: 512, 128>}, {transform_indices = @transform_6, window_bounds = array<i64: 8, 128>}]} {
    %c0 = arith.constant 0 : index
    %c0_0 = arith.constant 0 : index
    %0 = vector.load %arg1[%c0, %c0_0] : memref<8x6xf32, #tpu.memory_space<vmem>>, vector<8x6xf32>
    %1 = arith.truncf %0 : vector<8x6xf32> to vector<8x6xbf16>
    %c0_1 = arith.constant 0 : index
    %c0_2 = arith.constant 0 : index
    %2 = vector.load %arg2[%c0_1, %c0_2] : memref<6x512xbf16, #tpu.memory_space<vmem>>, vector<6x512xbf16>
    %cst = arith.constant dense<0.000000e+00> : vector<8x512xf32>
    %3 = tpu.matmul %1, %2, %cst {dimension_numbers = #tpu.dot_dimension_numbers<[1], [0], [0], [1], [0, 0, 1, 1], [], []>} : vector<8x6xbf16>, vector<6x512xbf16>, vector<8x512xf32> -> vector<8x512xf32>
    %c0_3 = arith.constant 0 : index
    %c0_4 = arith.constant 0 : index
    %4 = vector.load %arg3[%c0_3, %c0_4] : memref<1x512xf32, #tpu.memory_space<vmem>>, vector<1x512xf32>
    %5 = vector.broadcast %4 : vector<1x512xf32> to vector<8x512xf32>
    %6 = arith.addf %3, %5 : vector<8x512xf32>
    %cst_5 = arith.constant 0.000000e+00 : f32
    %7 = vector.broadcast %cst_5 : f32 to vector<8x512xf32>
    %8 = arith.maximumf %6, %7 : vector<8x512xf32>
    %9 = arith.truncf %8 : vector<8x512xf32> to vector<8x512xbf16>
    %c0_6 = arith.constant 0 : index
    %c0_7 = arith.constant 0 : index
    %10 = vector.load %arg4[%c0_6, %c0_7] : memref<512x512xbf16, #tpu.memory_space<vmem>>, vector<512x512xbf16>
    %cst_8 = arith.constant dense<0.000000e+00> : vector<8x512xf32>
    %11 = tpu.matmul %9, %10, %cst_8 {dimension_numbers = #tpu.dot_dimension_numbers<[1], [0], [0], [1], [0, 0, 1, 1], [], []>} : vector<8x512xbf16>, vector<512x512xbf16>, vector<8x512xf32> -> vector<8x512xf32>
    %c0_9 = arith.constant 0 : index
    %c0_10 = arith.constant 0 : index
    %12 = vector.load %arg5[%c0_9, %c0_10] : memref<1x512xf32, #tpu.memory_space<vmem>>, vector<1x512xf32>
    %13 = vector.broadcast %12 : vector<1x512xf32> to vector<8x512xf32>
    %14 = arith.addf %11, %13 : vector<8x512xf32>
    %cst_11 = arith.constant 0.000000e+00 : f32
    %15 = vector.broadcast %cst_11 : f32 to vector<8x512xf32>
    %16 = arith.maximumf %14, %15 : vector<8x512xf32>
    %17 = arith.truncf %16 : vector<8x512xf32> to vector<8x512xbf16>
    %c0_12 = arith.constant 0 : index
    %c0_13 = arith.constant 0 : index
    %18 = vector.load %arg6[%c0_12, %c0_13] : memref<512x128xbf16, #tpu.memory_space<vmem>>, vector<512x128xbf16>
    %cst_14 = arith.constant dense<0.000000e+00> : vector<8x128xf32>
    %19 = tpu.matmul %17, %18, %cst_14 {dimension_numbers = #tpu.dot_dimension_numbers<[1], [0], [0], [1], [0, 0, 1, 1], [], []>} : vector<8x512xbf16>, vector<512x128xbf16>, vector<8x128xf32> -> vector<8x128xf32>
    %c0_15 = arith.constant 0 : index
    %c0_16 = arith.constant 0 : index
    %20 = vector.load %arg7[%c0_15, %c0_16] : memref<8x128xf32, #tpu.memory_space<vmem>>, vector<8x128xf32>
    tpu.vector_store %arg7[%c0_15, %c0_16], %19 {strides = array<i32>} : memref<8x128xf32, #tpu.memory_space<vmem>>, vector<8x128xf32>,
    return
  }
  func.func @transform_0(%arg0: i32) -> (i32, i32) {
    %c0_i32 = arith.constant 0 : i32
    %c0_i32_0 = arith.constant 0 : i32
    return %arg0, %c0_i32 : i32, i32
  }
  func.func @transform_1(%arg0: i32) -> (i32, i32) {
    %c0_i32 = arith.constant 0 : i32
    %c0_i32_0 = arith.constant 0 : i32
    %c0_i32_1 = arith.constant 0 : i32
    return %c0_i32, %c0_i32_0 : i32, i32
  }
  func.func @transform_2(%arg0: i32) -> (i32, i32) {
    %c0_i32 = arith.constant 0 : i32
    %c0_i32_0 = arith.constant 0 : i32
    %c0_i32_1 = arith.constant 0 : i32
    return %c0_i32, %c0_i32_0 : i32, i32
  }
  func.func @transform_3(%arg0: i32) -> (i32, i32) {
    %c0_i32 = arith.constant 0 : i32
    %c0_i32_0 = arith.constant 0 : i32
    %c0_i32_1 = arith.constant 0 : i32
    return %c0_i32, %c0_i32_0 : i32, i32
  }
  func.func @transform_4(%arg0: i32) -> (i32, i32) {
    %c0_i32 = arith.constant 0 : i32
    %c0_i32_0 = arith.constant 0 : i32
    %c0_i32_1 = arith.constant 0 : i32
    return %c0_i32, %c0_i32_0 : i32, i32
  }
  func.func @transform_5(%arg0: i32) -> (i32, i32) {
    %c0_i32 = arith.constant 0 : i32
    %c0_i32_0 = arith.constant 0 : i32
    %c0_i32_1 = arith.constant 0 : i32
    return %c0_i32, %c0_i32_0 : i32, i32
  }
  func.func @transform_6(%arg0: i32) -> (i32, i32) {
    %c0_i32 = arith.constant 0 : i32
    %c0_i32_0 = arith.constant 0 : i32
    return %arg0, %c0_i32 : i32, i32
  }
}

</mosaic_0001>

<llo_original>
// kernel: neural_network_forward.1
$region0: #{neural_network_forward.1}
  #allocation0 [shape = 'u32[]', space=smem, size = 0x4, offset = 0x4, fixed_abs, tag = 'smem constant byte address 0x4 - core index']
  #allocation1 [shape = 'u32[72,128]{1,0:T(1,128)}', space=vmem, size = 0x9000, scoped, tag = 'internal scratch']
  %s0 = inlined_call_operand.vmem [shape: f32[8,6], index: 0, kind: input, shape index: {}]
  %s1 = inlined_call_operand.vmem [shape: bf16[6,512], index: 1, kind: input, shape index: {}]
  %s2 = inlined_call_operand.vmem [shape: f32[1,512], index: 2, kind: input, shape index: {}]
  %s3 = inlined_call_operand.vmem [shape: bf16[512,512], index: 3, kind: input, shape index: {}]
  %s4 = inlined_call_operand.vmem [shape: f32[1,512], index: 4, kind: input, shape index: {}]
  %s5 = inlined_call_operand.vmem [shape: bf16[512,128], index: 5, kind: input, shape index: {}]
  %s6 = inlined_call_operand.vmem [shape: f32[8,128], index: 6, kind: output, shape index: {}]
  %s7 = sld [smem:[#allocation0]]
  $region34: #{neural_network_forward.1} parent=0
    _
  %s9 = ssub.s32 1, %s7
  %s10 = scalar_select 0, %s9, %s7
  // Predicated region
  $region2: #{neural_network_forward.1} parent=0 // pred_check
    _
  $region3: #{neural_network_forward.1} parent=0 // pred_check_branch
    %12 = sbr.rel (0) target = $region5
  $region4: #{neural_network_forward.1} parent=0 // pred_region
    _
  $region5: #{neural_network_forward.1} parent=0 // pred_fallthru
    _
  // Predicated region
  $region6: #{neural_network_forward.1} parent=0 // pred_check
    _
  $region7: #{neural_network_forward.1} parent=0 // pred_check_branch
    %14 = sbr.rel (0) target = $region9
  $region8: #{neural_network_forward.1} parent=0 // pred_region
    _
  $region9: #{neural_network_forward.1} parent=0 // pred_fallthru
    _
  // Predicated region
  $region10: #{neural_network_forward.1} parent=0 // pred_check
    _
  $region11: #{neural_network_forward.1} parent=0 // pred_check_branch
    %16 = sbr.rel (0) target = $region13
  $region12: #{neural_network_forward.1} parent=0 // pred_region
    _
  $region13: #{neural_network_forward.1} parent=0 // pred_fallthru
    _
  // Predicated region
  $region14: #{neural_network_forward.1} parent=0 // pred_check
    _
  $region15: #{neural_network_forward.1} parent=0 // pred_check_branch
    %18 = sbr.rel (0) target = $region17
  $region16: #{neural_network_forward.1} parent=0 // pred_region
    _
  $region17: #{neural_network_forward.1} parent=0 // pred_fallthru
    _
  // Predicated region
  $region18: #{neural_network_forward.1} parent=0 // pred_check
    _
  $region19: #{neural_network_forward.1} parent=0 // pred_check_branch
    %20 = sbr.rel (0) target = $region21
  $region20: #{neural_network_forward.1} parent=0 // pred_region
    _
  $region21: #{neural_network_forward.1} parent=0 // pred_fallthru
    _
  // Predicated region
  $region22: #{neural_network_forward.1} parent=0 // pred_check
    _
  $region23: #{neural_network_forward.1} parent=0 // pred_check_branch
    %22 = sbr.rel (0) target = $region25
  $region24: #{neural_network_forward.1} parent=0 // pred_region
    _
  $region25: #{neural_network_forward.1} parent=0 // pred_fallthru
    _
  %v24 = vld [vmem:[%s0] sm:$0xff]
  %v25 = vpack.c.bf16 %v24, %v24
  %v26 = vld [vmem:[%s1] sm:$0x77]
  %v27 = vld [vmem:[%s1 + $0x8] sm:$0x77]
  %v28 = vld [vmem:[%s2] sm:$0xf]
  %v30 = vperm.slane %v28, 0
  %v31 = vperm.slane %v28, 1
  %v32 = vperm.slane %v28, 2
  %v33 = vperm.slane %v28, 3
  %v40 = vunpack.c.l.b16 %v26
  %v41 = vunpack.c.h.b16 %v26
  %v42 = vunpack.c.l.b16 %v27
  %v43 = vunpack.c.h.b16 %v27
  %v44 = vpack.c.b16 %v40, %v40
  %v45 = vpack.c.b16 %v41, %v41
  %v46 = vpack.c.b16 %v42, %v42
  %v47 = vpack.c.b16 %v43, %v43
  %vm48 = vcmask 48128
  %v50 = vsel %vm48, %v25, 0
  %vm52 = vcmask 1042432
  %v54 = vsel %vm52, %v44, 0
  %v57 = vsel %vm52, %v45, 0
  %v60 = vsel %vm52, %v46, 0
  %v63 = vsel %vm52, %v47, 0
  %65 = vmatpush.bf16.msra.mxu0 0
  %66 = vmatpush.bf16.msra.mxu0 0
  %67 = vmatpush.bf16.msra.mxu0 0
  %68 = vmatpush.bf16.msra.mxu0 0
  %69 = vmatpush.bf16.msra.mxu0 0
  %70 = vmatpush.bf16.msra.mxu0 0
  %71 = vmatpush.bf16.msra.mxu0 0
  %72 = vmatpush.bf16.msra.mxu0 %v54
  %73 = vmatmul.bf16.gmra.mxu0 %v50
  %v74 = vpop.f32.mrf.mxu0
  %v75 = vadd.f32 %v30, %v74
  %v76 = vpop.f32.mrf.mxu0
  %77 = vdwg.mxu0
  %78 = vmatpush.bf16.msra.mxu0 0
  %79 = vmatpush.bf16.msra.mxu0 0
  %80 = vmatpush.bf16.msra.mxu0 0
  %81 = vmatpush.bf16.msra.mxu0 0
  %82 = vmatpush.bf16.msra.mxu0 0
  %83 = vmatpush.bf16.msra.mxu0 0
  %84 = vmatpush.bf16.msra.mxu0 0
  %85 = vmatpush.bf16.msra.mxu0 %v57
  %86 = vmatmul.bf16.gmra.mxu0 %v50
  %v87 = vpop.f32.mrf.mxu0
  %v88 = vadd.f32 %v31, %v87
  %v89 = vpop.f32.mrf.mxu0
  %90 = vdwg.mxu0
  %91 = vmatpush.bf16.msra.mxu0 0
  %92 = vmatpush.bf16.msra.mxu0 0
  %93 = vmatpush.bf16.msra.mxu0 0
  %94 = vmatpush.bf16.msra.mxu0 0
  %95 = vmatpush.bf16.msra.mxu0 0
  %96 = vmatpush.bf16.msra.mxu0 0
  %97 = vmatpush.bf16.msra.mxu0 0
  %98 = vmatpush.bf16.msra.mxu0 %v60
  %99 = vmatmul.bf16.gmra.mxu0 %v50
  %v100 = vpop.f32.mrf.mxu0
  %v101 = vadd.f32 %v32, %v100
  %v102 = vpop.f32.mrf.mxu0
  %103 = vdwg.mxu0
  %104 = vmatpush.bf16.msra.mxu0 0
  %105 = vmatpush.bf16.msra.mxu0 0
  %106 = vmatpush.bf16.msra.mxu0 0
  %107 = vmatpush.bf16.msra.mxu0 0
  %108 = vmatpush.bf16.msra.mxu0 0
  %109 = vmatpush.bf16.msra.mxu0 0
  %110 = vmatpush.bf16.msra.mxu0 0
  %111 = vmatpush.bf16.msra.mxu0 %v63
  %112 = vmatmul.bf16.gmra.mxu0 %v50
  %v113 = vpop.f32.mrf.mxu0
  %v114 = vadd.f32 %v33, %v113
  %v115 = vpop.f32.mrf.mxu0
  %116 = vdwg.mxu0
  %v117 = vmax.f32 %v75, 0.0
  %v118 = vmax.f32 %v88, 0.0
  %v119 = vmax.f32 %v101, 0.0
  %v120 = vmax.f32 %v114, 0.0
  %v121 = vpack.c.bf16 %v117, %v117
  %v122 = vpack.c.bf16 %v118, %v118
  %v123 = vpack.c.bf16 %v119, %v119
  %v124 = vpack.c.bf16 %v120, %v120
  %v125 = vld [vmem:[%s3] sm:$0xff]
  %v126 = vld [vmem:[%s3 + $0x8] sm:$0xff]
  %v127 = vld [vmem:[%s3 + $0x10] sm:$0xff]
  %v128 = vld [vmem:[%s3 + $0x18] sm:$0xff]
  %v129 = vld [vmem:[%s3 + $0x20] sm:$0xff]
  %v130 = vld [vmem:[%s3 + $0x28] sm:$0xff]
  %v131 = vld [vmem:[%s3 + $0x30] sm:$0xff]
  %v132 = vld [vmem:[%s3 + $0x38] sm:$0xff]
  %v133 = vld [vmem:[%s3 + $0x40] sm:$0xff]
  %v134 = vld [vmem:[%s3 + $0x48] sm:$0xff]
  %v135 = vld [vmem:[%s3 + $0x50] sm:$0xff]
  %v136 = vld [vmem:[%s3 + $0x58] sm:$0xff]
  %v137 = vld [vmem:[%s3 + $0x60] sm:$0xff]
  %v138 = vld [vmem:[%s3 + $0x68] sm:$0xff]
  %v139 = vld [vmem:[%s3 + $0x70] sm:$0xff]
  %v140 = vld [vmem:[%s3 + $0x78] sm:$0xff]
  %v141 = vld [vmem:[%s3 + $0x80] sm:$0xff]
  %v142 = vld [vmem:[%s3 + $0x88] sm:$0xff]
  %v143 = vld [vmem:[%s3 + $0x90] sm:$0xff]
  %v144 = vld [vmem:[%s3 + $0x98] sm:$0xff]
  %v145 = vld [vmem:[%s3 + $0xa0] sm:$0xff]
  %v146 = vld [vmem:[%s3 + $0xa8] sm:$0xff]
  %v147 = vld [vmem:[%s3 + $0xb0] sm:$0xff]
  %v148 = vld [vmem:[%s3 + $0xb8] sm:$0xff]
  %v149 = vld [vmem:[%s3 + $0xc0] sm:$0xff]
  %v150 = vld [vmem:[%s3 + $0xc8] sm:$0xff]
  %v151 = vld [vmem:[%s3 + $0xd0] sm:$0xff]
  %v152 = vld [vmem:[%s3 + $0xd8] sm:$0xff]
  %v153 = vld [vmem:[%s3 + $0xe0] sm:$0xff]
  %v154 = vld [vmem:[%s3 + $0xe8] sm:$0xff]
  %v155 = vld [vmem:[%s3 + $0xf0] sm:$0xff]
  %v156 = vld [vmem:[%s3 + $0xf8] sm:$0xff]
  %v157 = vld [vmem:[%s3 + $0x100] sm:$0xff]
  %v158 = vld [vmem:[%s3 + $0x108] sm:$0xff]
  %v159 = vld [vmem:[%s3 + $0x110] sm:$0xff]
  %v160 = vld [vmem:[%s3 + $0x118] sm:$0xff]
  %v161 = vld [vmem:[%s3 + $0x120] sm:$0xff]
  %v162 = vld [vmem:[%s3 + $0x128] sm:$0xff]
  %v163 = vld [vmem:[%s3 + $0x130] sm:$0xff]
  %v164 = vld [vmem:[%s3 + $0x138] sm:$0xff]
  %v165 = vld [vmem:[%s3 + $0x140] sm:$0xff]
  %v166 = vld [vmem:[%s3 + $0x148] sm:$0xff]
  %v167 = vld [vmem:[%s3 + $0x150] sm:$0xff]
  %v168 = vld [vmem:[%s3 + $0x158] sm:$0xff]
  %v169 = vld [vmem:[%s3 + $0x160] sm:$0xff]
  %v170 = vld [vmem:[%s3 + $0x168] sm:$0xff]
  %v171 = vld [vmem:[%s3 + $0x170] sm:$0xff]
  %v172 = vld [vmem:[%s3 + $0x178] sm:$0xff]
  %v173 = vld [vmem:[%s3 + $0x180] sm:$0xff]
  %v174 = vld [vmem:[%s3 + $0x188] sm:$0xff]
  %v175 = vld [vmem:[%s3 + $0x190] sm:$0xff]
  %v176 = vld [vmem:[%s3 + $0x198] sm:$0xff]
  %v177 = vld [vmem:[%s3 + $0x1a0] sm:$0xff]
  %v178 = vld [vmem:[%s3 + $0x1a8] sm:$0xff]
  %v179 = vld [vmem:[%s3 + $0x1b0] sm:$0xff]
  %v180 = vld [vmem:[%s3 + $0x1b8] sm:$0xff]
  %v181 = vld [vmem:[%s3 + $0x1c0] sm:$0xff]
  %v182 = vld [vmem:[%s3 + $0x1c8] sm:$0xff]
  %v183 = vld [vmem:[%s3 + $0x1d0] sm:$0xff]
  %v184 = vld [vmem:[%s3 + $0x1d8] sm:$0xff]
  %v185 = vld [vmem:[%s3 + $0x1e0] sm:$0xff]
  %v186 = vld [vmem:[%s3 + $0x1e8] sm:$0xff]
  %v187 = vld [vmem:[%s3 + $0x1f0] sm:$0xff]
  %v188 = vld [vmem:[%s3 + $0x1f8] sm:$0xff]
  %v189 = vld [vmem:[%s3 + $0x200] sm:$0xff]
  %v190 = vld [vmem:[%s3 + $0x208] sm:$0xff]
  %v191 = vld [vmem:[%s3 + $0x210] sm:$0xff]
  %v192 = vld [vmem:[%s3 + $0x218] sm:$0xff]
  %v193 = vld [vmem:[%s3 + $0x220] sm:$0xff]
  %v194 = vld [vmem:[%s3 + $0x228] sm:$0xff]
  %v195 = vld [vmem:[%s3 + $0x230] sm:$0xff]
  %v196 = vld [vmem:[%s3 + $0x238] sm:$0xff]
  %v197 = vld [vmem:[%s3 + $0x240] sm:$0xff]
  %v198 = vld [vmem:[%s3 + $0x248] sm:$0xff]
  %v199 = vld [vmem:[%s3 + $0x250] sm:$0xff]
  %v200 = vld [vmem:[%s3 + $0x258] sm:$0xff]
  %v201 = vld [vmem:[%s3 + $0x260] sm:$0xff]
  %v202 = vld [vmem:[%s3 + $0x268] sm:$0xff]
  %v203 = vld [vmem:[%s3 + $0x270] sm:$0xff]
  %v204 = vld [vmem:[%s3 + $0x278] sm:$0xff]
  %v205 = vld [vmem:[%s3 + $0x280] sm:$0xff]
  %v206 = vld [vmem:[%s3 + $0x288] sm:$0xff]
  %v207 = vld [vmem:[%s3 + $0x290] sm:$0xff]
  %v208 = vld [vmem:[%s3 + $0x298] sm:$0xff]
  %v209 = vld [vmem:[%s3 + $0x2a0] sm:$0xff]
  %v210 = vld [vmem:[%s3 + $0x2a8] sm:$0xff]
  %v211 = vld [vmem:[%s3 + $0x2b0] sm:$0xff]
  %v212 = vld [vmem:[%s3 + $0x2b8] sm:$0xff]
  %v213 = vld [vmem:[%s3 + $0x2c0] sm:$0xff]
  %v214 = vld [vmem:[%s3 + $0x2c8] sm:$0xff]
  %v215 = vld [vmem:[%s3 + $0x2d0] sm:$0xff]
  %v216 = vld [vmem:[%s3 + $0x2d8] sm:$0xff]
  %v217 = vld [vmem:[%s3 + $0x2e0] sm:$0xff]
  %v218 = vld [vmem:[%s3 + $0x2e8] sm:$0xff]
  %v219 = vld [vmem:[%s3 + $0x2f0] sm:$0xff]
  %v220 = vld [vmem:[%s3 + $0x2f8] sm:$0xff]
  %v221 = vld [vmem:[%s3 + $0x300] sm:$0xff]
  %v222 = vld [vmem:[%s3 + $0x308] sm:$0xff]
  %v223 = vld [vmem:[%s3 + $0x310] sm:$0xff]
  %v224 = vld [vmem:[%s3 + $0x318] sm:$0xff]
  %v225 = vld [vmem:[%s3 + $0x320] sm:$0xff]
  %v226 = vld [vmem:[%s3 + $0x328] sm:$0xff]
  %v227 = vld [vmem:[%s3 + $0x330] sm:$0xff]
  %v228 = vld [vmem:[%s3 + $0x338] sm:$0xff]
  %v229 = vld [vmem:[%s3 + $0x340] sm:$0xff]
  %v230 = vld [vmem:[%s3 + $0x348] sm:$0xff]
  %v231 = vld [vmem:[%s3 + $0x350] sm:$0xff]
  %v232 = vld [vmem:[%s3 + $0x358] sm:$0xff]
  %v233 = vld [vmem:[%s3 + $0x360] sm:$0xff]
  %v234 = vld [vmem:[%s3 + $0x368] sm:$0xff]
  %v235 = vld [vmem:[%s3 + $0x370] sm:$0xff]
  %v236 = vld [vmem:[%s3 + $0x378] sm:$0xff]
  %v237 = vld [vmem:[%s3 + $0x380] sm:$0xff]
  %v238 = vld [vmem:[%s3 + $0x388] sm:$0xff]
  %v239 = vld [vmem:[%s3 + $0x390] sm:$0xff]
  %v240 = vld [vmem:[%s3 + $0x398] sm:$0xff]
  %v241 = vld [vmem:[%s3 + $0x3a0] sm:$0xff]
  %v242 = vld [vmem:[%s3 + $0x3a8] sm:$0xff]
  %v243 = vld [vmem:[%s3 + $0x3b0] sm:$0xff]
  %v244 = vld [vmem:[%s3 + $0x3b8] sm:$0xff]
  %v245 = vld [vmem:[%s3 + $0x3c0] sm:$0xff]
  %v246 = vld [vmem:[%s3 + $0x3c8] sm:$0xff]
  %v247 = vld [vmem:[%s3 + $0x3d0] sm:$0xff]
  %v248 = vld [vmem:[%s3 + $0x3d8] sm:$0xff]
  %v249 = vld [vmem:[%s3 + $0x3e0] sm:$0xff]
  %v250 = vld [vmem:[%s3 + $0x3e8] sm:$0xff]
  %v251 = vld [vmem:[%s3 + $0x3f0] sm:$0xff]
  %v252 = vld [vmem:[%s3 + $0x3f8] sm:$0xff]
  %v253 = vld [vmem:[%s4] sm:$0xf]
  %v255 = vperm.slane %v253, 0
  %v256 = vperm.slane %v253, 1
  %v257 = vperm.slane %v253, 2
  %v258 = vperm.slane %v253, 3
  %v391 = vunpack.c.l.b16 %v125
  %v392 = vunpack.c.h.b16 %v125
  %v393 = vunpack.c.l.b16 %v126
  %v394 = vunpack.c.h.b16 %v126
  %v395 = vunpack.c.l.b16 %v127
  %v396 = vunpack.c.h.b16 %v127
  %v397 = vunpack.c.l.b16 %v128
  %v398 = vunpack.c.h.b16 %v128
  %v399 = vunpack.c.l.b16 %v129
  %v400 = vunpack.c.h.b16 %v129
  %v401 = vunpack.c.l.b16 %v130
  %v402 = vunpack.c.h.b16 %v130
  %v403 = vunpack.c.l.b16 %v131
  %v404 = vunpack.c.h.b16 %v131
  %v405 = vunpack.c.l.b16 %v132
  %v406 = vunpack.c.h.b16 %v132
  %v407 = vunpack.c.l.b16 %v133
  %v408 = vunpack.c.h.b16 %v133
  %v409 = vunpack.c.l.b16 %v134
  %v410 = vunpack.c.h.b16 %v134
  %v411 = vunpack.c.l.b16 %v135
  %v412 = vunpack.c.h.b16 %v135
  %v413 = vunpack.c.l.b16 %v136
  %v414 = vunpack.c.h.b16 %v136
  %v415 = vunpack.c.l.b16 %v137
  %v416 = vunpack.c.h.b16 %v137
  %v417 = vunpack.c.l.b16 %v138
  %v418 = vunpack.c.h.b16 %v138
  %v419 = vunpack.c.l.b16 %v139
  %v420 = vunpack.c.h.b16 %v139
  %v421 = vunpack.c.l.b16 %v140
  %v422 = vunpack.c.h.b16 %v140
  %v423 = vunpack.c.l.b16 %v141
  %v424 = vunpack.c.h.b16 %v141
  %v425 = vunpack.c.l.b16 %v142
  %v426 = vunpack.c.h.b16 %v142
  %v427 = vunpack.c.l.b16 %v143
  %v428 = vunpack.c.h.b16 %v143
  %v429 = vunpack.c.l.b16 %v144
  %v430 = vunpack.c.h.b16 %v144
  %v431 = vunpack.c.l.b16 %v145
  %v432 = vunpack.c.h.b16 %v145
  %v433 = vunpack.c.l.b16 %v146
  %v434 = vunpack.c.h.b16 %v146
  %v435 = vunpack.c.l.b16 %v147
  %v436 = vunpack.c.h.b16 %v147
  %v437 = vunpack.c.l.b16 %v148
  %v438 = vunpack.c.h.b16 %v148
  %v439 = vunpack.c.l.b16 %v149
  %v440 = vunpack.c.h.b16 %v149
  %v441 = vunpack.c.l.b16 %v150
  %v442 = vunpack.c.h.b16 %v150
  %v443 = vunpack.c.l.b16 %v151
  %v444 = vunpack.c.h.b16 %v151
  %v445 = vunpack.c.l.b16 %v152
  %v446 = vunpack.c.h.b16 %v152
  %v447 = vunpack.c.l.b16 %v153
  %v448 = vunpack.c.h.b16 %v153
  %v449 = vunpack.c.l.b16 %v154
  %v450 = vunpack.c.h.b16 %v154
  %v451 = vunpack.c.l.b16 %v155
  %v452 = vunpack.c.h.b16 %v155
  %v453 = vunpack.c.l.b16 %v156
  %v454 = vunpack.c.h.b16 %v156
  %v455 = vunpack.c.l.b16 %v157
  %v456 = vunpack.c.h.b16 %v157
  %v457 = vunpack.c.l.b16 %v158
  %v458 = vunpack.c.h.b16 %v158
  %v459 = vunpack.c.l.b16 %v159
  %v460 = vunpack.c.h.b16 %v159
  %v461 = vunpack.c.l.b16 %v160
  %v462 = vunpack.c.h.b16 %v160
  %v463 = vunpack.c.l.b16 %v161
  %v464 = vunpack.c.h.b16 %v161
  %v465 = vunpack.c.l.b16 %v162
  %v466 = vunpack.c.h.b16 %v162
  %v467 = vunpack.c.l.b16 %v163
  %v468 = vunpack.c.h.b16 %v163
  %v469 = vunpack.c.l.b16 %v164
  %v470 = vunpack.c.h.b16 %v164
  %v471 = vunpack.c.l.b16 %v165
  %v472 = vunpack.c.h.b16 %v165
  %v473 = vunpack.c.l.b16 %v166
  %v474 = vunpack.c.h.b16 %v166
  %v475 = vunpack.c.l.b16 %v167
  %v476 = vunpack.c.h.b16 %v167
  %v477 = vunpack.c.l.b16 %v168
  %v478 = vunpack.c.h.b16 %v168
  %v479 = vunpack.c.l.b16 %v169
  %v480 = vunpack.c.h.b16 %v169
  %v481 = vunpack.c.l.b16 %v170
  %v482 = vunpack.c.h.b16 %v170
  %v483 = vunpack.c.l.b16 %v171
  %v484 = vunpack.c.h.b16 %v171
  %v485 = vunpack.c.l.b16 %v172
  %v486 = vunpack.c.h.b16 %v172
  %v487 = vunpack.c.l.b16 %v173
  %v488 = vunpack.c.h.b16 %v173
  %v489 = vunpack.c.l.b16 %v174
  %v490 = vunpack.c.h.b16 %v174
  %v491 = vunpack.c.l.b16 %v175
  %v492 = vunpack.c.h.b16 %v175
  %v493 = vunpack.c.l.b16 %v176
  %v494 = vunpack.c.h.b16 %v176
  %v495 = vunpack.c.l.b16 %v177
  %v496 = vunpack.c.h.b16 %v177
  %v497 = vunpack.c.l.b16 %v178
  %v498 = vunpack.c.h.b16 %v178
  %v499 = vunpack.c.l.b16 %v179
  %v500 = vunpack.c.h.b16 %v179
  %v501 = vunpack.c.l.b16 %v180
  %v502 = vunpack.c.h.b16 %v180
  %v503 = vunpack.c.l.b16 %v181
  %v504 = vunpack.c.h.b16 %v181
  %v505 = vunpack.c.l.b16 %v182
  %v506 = vunpack.c.h.b16 %v182
  %v507 = vunpack.c.l.b16 %v183
  %v508 = vunpack.c.h.b16 %v183
  %v509 = vunpack.c.l.b16 %v184
  %v510 = vunpack.c.h.b16 %v184
  %v511 = vunpack.c.l.b16 %v185
  %v512 = vunpack.c.h.b16 %v185
  %v513 = vunpack.c.l.b16 %v186
  %v514 = vunpack.c.h.b16 %v186
  %v515 = vunpack.c.l.b16 %v187
  %v516 = vunpack.c.h.b16 %v187
  %v517 = vunpack.c.l.b16 %v188
  %v518 = vunpack.c.h.b16 %v188
  %v519 = vunpack.c.l.b16 %v189
  %v520 = vunpack.c.h.b16 %v189
  %v521 = vunpack.c.l.b16 %v190
  %v522 = vunpack.c.h.b16 %v190
  %v523 = vunpack.c.l.b16 %v191
  %v524 = vunpack.c.h.b16 %v191
  %v525 = vunpack.c.l.b16 %v192
  %v526 = vunpack.c.h.b16 %v192
  %v527 = vunpack.c.l.b16 %v193
  %v528 = vunpack.c.h.b16 %v193
  %v529 = vunpack.c.l.b16 %v194
  %v530 = vunpack.c.h.b16 %v194
  %v531 = vunpack.c.l.b16 %v195
  %v532 = vunpack.c.h.b16 %v195
  %v533 = vunpack.c.l.b16 %v196
  %v534 = vunpack.c.h.b16 %v196
  %v535 = vunpack.c.l.b16 %v197
  %v536 = vunpack.c.h.b16 %v197
  %v537 = vunpack.c.l.b16 %v198
  %v538 = vunpack.c.h.b16 %v198
  %v539 = vunpack.c.l.b16 %v199
  %v540 = vunpack.c.h.b16 %v199
  %v541 = vunpack.c.l.b16 %v200
  %v542 = vunpack.c.h.b16 %v200
  %v543 = vunpack.c.l.b16 %v201
  %v544 = vunpack.c.h.b16 %v201
  %v545 = vunpack.c.l.b16 %v202
  %v546 = vunpack.c.h.b16 %v202
  %v547 = vunpack.c.l.b16 %v203
  %v548 = vunpack.c.h.b16 %v203
  %v549 = vunpack.c.l.b16 %v204
  %v550 = vunpack.c.h.b16 %v204
  %v551 = vunpack.c.l.b16 %v205
  %v552 = vunpack.c.h.b16 %v205
  %v553 = vunpack.c.l.b16 %v206
  %v554 = vunpack.c.h.b16 %v206
  %v555 = vunpack.c.l.b16 %v207
  %v556 = vunpack.c.h.b16 %v207
  %v557 = vunpack.c.l.b16 %v208
  %v558 = vunpack.c.h.b16 %v208
  %v559 = vunpack.c.l.b16 %v209
  %v560 = vunpack.c.h.b16 %v209
  %v561 = vunpack.c.l.b16 %v210
  %v562 = vunpack.c.h.b16 %v210
  %v563 = vunpack.c.l.b16 %v211
  %v564 = vunpack.c.h.b16 %v211
  %v565 = vunpack.c.l.b16 %v212
  %v566 = vunpack.c.h.b16 %v212
  %v567 = vunpack.c.l.b16 %v213
  %v568 = vunpack.c.h.b16 %v213
  %v569 = vunpack.c.l.b16 %v214
  %v570 = vunpack.c.h.b16 %v214
  %v571 = vunpack.c.l.b16 %v215
  %v572 = vunpack.c.h.b16 %v215
  %v573 = vunpack.c.l.b16 %v216
  %v574 = vunpack.c.h.b16 %v216
  %v575 = vunpack.c.l.b16 %v217
  %v576 = vunpack.c.h.b16 %v217
  %v577 = vunpack.c.l.b16 %v218
  %v578 = vunpack.c.h.b16 %v218
  %v579 = vunpack.c.l.b16 %v219
  %v580 = vunpack.c.h.b16 %v219
  %v581 = vunpack.c.l.b16 %v220
  %v582 = vunpack.c.h.b16 %v220
  %v583 = vunpack.c.l.b16 %v221
  %v584 = vunpack.c.h.b16 %v221
  %v585 = vunpack.c.l.b16 %v222
  %v586 = vunpack.c.h.b16 %v222
  %v587 = vunpack.c.l.b16 %v223
  %v588 = vunpack.c.h.b16 %v223
  %v589 = vunpack.c.l.b16 %v224
  %v590 = vunpack.c.h.b16 %v224
  %v591 = vunpack.c.l.b16 %v225
  %v592 = vunpack.c.h.b16 %v225
  %v593 = vunpack.c.l.b16 %v226
  %v594 = vunpack.c.h.b16 %v226
  %v595 = vunpack.c.l.b16 %v227
  %v596 = vunpack.c.h.b16 %v227
  %v597 = vunpack.c.l.b16 %v228
  %v598 = vunpack.c.h.b16 %v228
  %v599 = vunpack.c.l.b16 %v229
  %v600 = vunpack.c.h.b16 %v229
  %v601 = vunpack.c.l.b16 %v230
  %v602 = vunpack.c.h.b16 %v230
  %v603 = vunpack.c.l.b16 %v231
  %v604 = vunpack.c.h.b16 %v231
  %v605 = vunpack.c.l.b16 %v232
  %v606 = vunpack.c.h.b16 %v232
  %v607 = vunpack.c.l.b16 %v233
  %v608 = vunpack.c.h.b16 %v233
  %v609 = vunpack.c.l.b16 %v234
  %v610 = vunpack.c.h.b16 %v234
  %v611 = vunpack.c.l.b16 %v235
  %v612 = vunpack.c.h.b16 %v235
  %v613 = vunpack.c.l.b16 %v236
  %v614 = vunpack.c.h.b16 %v236
  %v615 = vunpack.c.l.b16 %v237
  %v616 = vunpack.c.h.b16 %v237
  %v617 = vunpack.c.l.b16 %v238
  %v618 = vunpack.c.h.b16 %v238
  %v619 = vunpack.c.l.b16 %v239
  %v620 = vunpack.c.h.b16 %v239
  %v621 = vunpack.c.l.b16 %v240
  %v622 = vunpack.c.h.b16 %v240
  %v623 = vunpack.c.l.b16 %v241
  %v624 = vunpack.c.h.b16 %v241
  %v625 = vunpack.c.l.b16 %v242
  %v626 = vunpack.c.h.b16 %v242
  %v627 = vunpack.c.l.b16 %v243
  %v628 = vunpack.c.h.b16 %v243
  %v629 = vunpack.c.l.b16 %v244
  %v630 = vunpack.c.h.b16 %v244
  %v631 = vunpack.c.l.b16 %v245
  %v632 = vunpack.c.h.b16 %v245
  %v633 = vunpack.c.l.b16 %v246
  %v634 = vunpack.c.h.b16 %v246
  %v635 = vunpack.c.l.b16 %v247
  %v636 = vunpack.c.h.b16 %v247
  %v637 = vunpack.c.l.b16 %v248
  %v638 = vunpack.c.h.b16 %v248
  %v639 = vunpack.c.l.b16 %v249
  %v640 = vunpack.c.h.b16 %v249
  %v641 = vunpack.c.l.b16 %v250
  %v642 = vunpack.c.h.b16 %v250
  %v643 = vunpack.c.l.b16 %v251
  %v644 = vunpack.c.h.b16 %v251
  %v645 = vunpack.c.l.b16 %v252
  %v646 = vunpack.c.h.b16 %v252
  %v647 = vpack.c.b16 %v395, %v391
  %v648 = vpack.c.b16 %v396, %v392
  %v649 = vpack.c.b16 %v397, %v393
  %v650 = vpack.c.b16 %v398, %v394
  %v651 = vpack.c.b16 %v403, %v399
  %v652 = vpack.c.b16 %v404, %v400
  %v653 = vpack.c.b16 %v405, %v401
  %v654 = vpack.c.b16 %v406, %v402
  %v655 = vpack.c.b16 %v411, %v407
  %v656 = vpack.c.b16 %v412, %v408
  %v657 = vpack.c.b16 %v413, %v409
  %v658 = vpack.c.b16 %v414, %v410
  %v659 = vpack.c.b16 %v419, %v415
  %v660 = vpack.c.b16 %v420, %v416
  %v661 = vpack.c.b16 %v421, %v417
  %v662 = vpack.c.b16 %v422, %v418
  %v663 = vpack.c.b16 %v427, %v423
  %v664 = vpack.c.b16 %v428, %v424
  %v665 = vpack.c.b16 %v429, %v425
  %v666 = vpack.c.b16 %v430, %v426
  %v667 = vpack.c.b16 %v435, %v431
  %v668 = vpack.c.b16 %v436, %v432
  %v669 = vpack.c.b16 %v437, %v433
  %v670 = vpack.c.b16 %v438, %v434
  %v671 = vpack.c.b16 %v443, %v439
  %v672 = vpack.c.b16 %v444, %v440
  %v673 = vpack.c.b16 %v445, %v441
  %v674 = vpack.c.b16 %v446, %v442
  %v675 = vpack.c.b16 %v451, %v447
  %v676 = vpack.c.b16 %v452, %v448
  %v677 = vpack.c.b16 %v453, %v449
  %v678 = vpack.c.b16 %v454, %v450
  %v679 = vpack.c.b16 %v459, %v455
  %v680 = vpack.c.b16 %v460, %v456
  %v681 = vpack.c.b16 %v461, %v457
  %v682 = vpack.c.b16 %v462, %v458
  %v683 = vpack.c.b16 %v467, %v463
  %v684 = vpack.c.b16 %v468, %v464
  %v685 = vpack.c.b16 %v469, %v465
  %v686 = vpack.c.b16 %v470, %v466
  %v687 = vpack.c.b16 %v475, %v471
  %v688 = vpack.c.b16 %v476, %v472
  %v689 = vpack.c.b16 %v477, %v473
  %v690 = vpack.c.b16 %v478, %v474
  %v691 = vpack.c.b16 %v483, %v479
  %v692 = vpack.c.b16 %v484, %v480
  %v693 = vpack.c.b16 %v485, %v481
  %v694 = vpack.c.b16 %v486, %v482
  %v695 = vpack.c.b16 %v491, %v487
  %v696 = vpack.c.b16 %v492, %v488
  %v697 = vpack.c.b16 %v493, %v489
  %v698 = vpack.c.b16 %v494, %v490
  %v699 = vpack.c.b16 %v499, %v495
  %v700 = vpack.c.b16 %v500, %v496
  %v701 = vpack.c.b16 %v501, %v497
  %v702 = vpack.c.b16 %v502, %v498
  %v703 = vpack.c.b16 %v507, %v503
  %v704 = vpack.c.b16 %v508, %v504
  %v705 = vpack.c.b16 %v509, %v505
  %v706 = vpack.c.b16 %v510, %v506
  %v707 = vpack.c.b16 %v515, %v511
  %v708 = vpack.c.b16 %v516, %v512
  %v709 = vpack.c.b16 %v517, %v513
  %v710 = vpack.c.b16 %v518, %v514
  %v711 = vpack.c.b16 %v523, %v519
  %v712 = vpack.c.b16 %v524, %v520
  %v713 = vpack.c.b16 %v525, %v521
  %v714 = vpack.c.b16 %v526, %v522
  %v715 = vpack.c.b16 %v531, %v527
  %v716 = vpack.c.b16 %v532, %v528
  %v717 = vpack.c.b16 %v533, %v529
  %v718 = vpack.c.b16 %v534, %v530
  %v719 = vpack.c.b16 %v539, %v535
  %v720 = vpack.c.b16 %v540, %v536
  %v721 = vpack.c.b16 %v541, %v537
  %v722 = vpack.c.b16 %v542, %v538
  %v723 = vpack.c.b16 %v547, %v543
  %v724 = vpack.c.b16 %v548, %v544
  %v725 = vpack.c.b16 %v549, %v545
  %v726 = vpack.c.b16 %v550, %v546
  %v727 = vpack.c.b16 %v555, %v551
  %v728 = vpack.c.b16 %v556, %v552
  %v729 = vpack.c.b16 %v557, %v553
  %v730 = vpack.c.b16 %v558, %v554
  %v731 = vpack.c.b16 %v563, %v559
  %v732 = vpack.c.b16 %v564, %v560
  %v733 = vpack.c.b16 %v565, %v561
  %v734 = vpack.c.b16 %v566, %v562
  %v735 = vpack.c.b16 %v571, %v567
  %v736 = vpack.c.b16 %v572, %v568
  %v737 = vpack.c.b16 %v573, %v569
  %v738 = vpack.c.b16 %v574, %v570
  %v739 = vpack.c.b16 %v579, %v575
  %v740 = vpack.c.b16 %v580, %v576
  %v741 = vpack.c.b16 %v581, %v577
  %v742 = vpack.c.b16 %v582, %v578
  %v743 = vpack.c.b16 %v587, %v583
  %v744 = vpack.c.b16 %v588, %v584
  %v745 = vpack.c.b16 %v589, %v585
  %v746 = vpack.c.b16 %v590, %v586
  %v747 = vpack.c.b16 %v595, %v591
  %v748 = vpack.c.b16 %v596, %v592
  %v749 = vpack.c.b16 %v597, %v593
  %v750 = vpack.c.b16 %v598, %v594
  %v751 = vpack.c.b16 %v603, %v599
  %v752 = vpack.c.b16 %v604, %v600
  %v753 = vpack.c.b16 %v605, %v601
  %v754 = vpack.c.b16 %v606, %v602
  %v755 = vpack.c.b16 %v611, %v607
  %v756 = vpack.c.b16 %v612, %v608
  %v757 = vpack.c.b16 %v613, %v609
  %v758 = vpack.c.b16 %v614, %v610
  %v759 = vpack.c.b16 %v619, %v615
  %v760 = vpack.c.b16 %v620, %v616
  %v761 = vpack.c.b16 %v621, %v617
  %v762 = vpack.c.b16 %v622, %v618
  %v763 = vpack.c.b16 %v627, %v623
  %v764 = vpack.c.b16 %v628, %v624
  %v765 = vpack.c.b16 %v629, %v625
  %v766 = vpack.c.b16 %v630, %v626
  %v767 = vpack.c.b16 %v635, %v631
  %v768 = vpack.c.b16 %v636, %v632
  %v769 = vpack.c.b16 %v637, %v633
  %v770 = vpack.c.b16 %v638, %v634
  %v771 = vpack.c.b16 %v643, %v639
  %v772 = vpack.c.b16 %v644, %v640
  %v773 = vpack.c.b16 %v645, %v641
  %v774 = vpack.c.b16 %v646, %v642
  %903 = vmatpush.bf16.msra.mxu0 %v675
  %904 = vmatpush.bf16.msra.mxu0 %v671
  %905 = vmatpush.bf16.msra.mxu0 %v667
  %906 = vmatpush.bf16.msra.mxu0 %v663
  %907 = vmatpush.bf16.msra.mxu0 %v659
  %908 = vmatpush.bf16.msra.mxu0 %v655
  %909 = vmatpush.bf16.msra.mxu0 %v651
  %910 = vmatpush.bf16.msra.mxu0 %v647
  %911 = vmatmul.bf16.gmra.mxu0 %v121
  %v912 = vpop.f32.mrf.mxu0
  %v913 = vadd.f32 %v255, %v912
  %v914 = vpop.f32.mrf.mxu0
  %915 = vdwg.mxu0
  %916 = vmatpush.bf16.msra.mxu0 %v707
  %917 = vmatpush.bf16.msra.mxu0 %v703
  %918 = vmatpush.bf16.msra.mxu0 %v699
  %919 = vmatpush.bf16.msra.mxu0 %v695
  %920 = vmatpush.bf16.msra.mxu0 %v691
  %921 = vmatpush.bf16.msra.mxu0 %v687
  %922 = vmatpush.bf16.msra.mxu0 %v683
  %923 = vmatpush.bf16.msra.mxu0 %v679
  %924 = vmatmul.bf16.gmra.mxu0 %v122
  %v925 = vpop.f32.mrf.mxu0
  %v926 = vadd.f32 %v913, %v925
  %v927 = vpop.f32.mrf.mxu0
  %928 = vdwg.mxu0
  %929 = vmatpush.bf16.msra.mxu0 %v739
  %930 = vmatpush.bf16.msra.mxu0 %v735
  %931 = vmatpush.bf16.msra.mxu0 %v731
  %932 = vmatpush.bf16.msra.mxu0 %v727
  %933 = vmatpush.bf16.msra.mxu0 %v723
  %934 = vmatpush.bf16.msra.mxu0 %v719
  %935 = vmatpush.bf16.msra.mxu0 %v715
  %936 = vmatpush.bf16.msra.mxu0 %v711
  %937 = vmatmul.bf16.gmra.mxu0 %v123
  %v938 = vpop.f32.mrf.mxu0
  %v939 = vadd.f32 %v926, %v938
  %v940 = vpop.f32.mrf.mxu0
  %941 = vdwg.mxu0
  %942 = vmatpush.bf16.msra.mxu0 %v771
  %943 = vmatpush.bf16.msra.mxu0 %v767
  %944 = vmatpush.bf16.msra.mxu0 %v763
  %945 = vmatpush.bf16.msra.mxu0 %v759
  %946 = vmatpush.bf16.msra.mxu0 %v755
  %947 = vmatpush.bf16.msra.mxu0 %v751
  %948 = vmatpush.bf16.msra.mxu0 %v747
  %949 = vmatpush.bf16.msra.mxu0 %v743
  %950 = vmatmul.bf16.gmra.mxu0 %v124
  %v951 = vpop.f32.mrf.mxu0
  %v952 = vadd.f32 %v939, %v951
  %v953 = vpop.f32.mrf.mxu0
  %954 = vdwg.mxu0
  %955 = vmatpush.bf16.msra.mxu0 %v676
  %956 = vmatpush.bf16.msra.mxu0 %v672
  %957 = vmatpush.bf16.msra.mxu0 %v668
  %958 = vmatpush.bf16.msra.mxu0 %v664
  %959 = vmatpush.bf16.msra.mxu0 %v660
  %960 = vmatpush.bf16.msra.mxu0 %v656
  %961 = vmatpush.bf16.msra.mxu0 %v652
  %962 = vmatpush.bf16.msra.mxu0 %v648
  %963 = vmatmul.bf16.gmra.mxu0 %v121
  %v964 = vpop.f32.mrf.mxu0
  %v965 = vadd.f32 %v256, %v964
  %v966 = vpop.f32.mrf.mxu0
  %967 = vdwg.mxu0
  %968 = vmatpush.bf16.msra.mxu0 %v708
  %969 = vmatpush.bf16.msra.mxu0 %v704
  %970 = vmatpush.bf16.msra.mxu0 %v700
  %971 = vmatpush.bf16.msra.mxu0 %v696
  %972 = vmatpush.bf16.msra.mxu0 %v692
  %973 = vmatpush.bf16.msra.mxu0 %v688
  %974 = vmatpush.bf16.msra.mxu0 %v684
  %975 = vmatpush.bf16.msra.mxu0 %v680
  %976 = vmatmul.bf16.gmra.mxu0 %v122
  %v977 = vpop.f32.mrf.mxu0
  %v978 = vadd.f32 %v965, %v977
  %v979 = vpop.f32.mrf.mxu0
  %980 = vdwg.mxu0
  %981 = vmatpush.bf16.msra.mxu0 %v740
  %982 = vmatpush.bf16.msra.mxu0 %v736
  %983 = vmatpush.bf16.msra.mxu0 %v732
  %984 = vmatpush.bf16.msra.mxu0 %v728
  %985 = vmatpush.bf16.msra.mxu0 %v724
  %986 = vmatpush.bf16.msra.mxu0 %v720
  %987 = vmatpush.bf16.msra.mxu0 %v716
  %988 = vmatpush.bf16.msra.mxu0 %v712
  %989 = vmatmul.bf16.gmra.mxu0 %v123
  %v990 = vpop.f32.mrf.mxu0
  %v991 = vadd.f32 %v978, %v990
  %v992 = vpop.f32.mrf.mxu0
  %993 = vdwg.mxu0
  %994 = vmatpush.bf16.msra.mxu0 %v772
  %995 = vmatpush.bf16.msra.mxu0 %v768
  %996 = vmatpush.bf16.msra.mxu0 %v764
  %997 = vmatpush.bf16.msra.mxu0 %v760
  %998 = vmatpush.bf16.msra.mxu0 %v756
  %999 = vmatpush.bf16.msra.mxu0 %v752
  %1000 = vmatpush.bf16.msra.mxu0 %v748
  %1001 = vmatpush.bf16.msra.mxu0 %v744
  %1002 = vmatmul.bf16.gmra.mxu0 %v124
  %v1003 = vpop.f32.mrf.mxu0
  %v1004 = vadd.f32 %v991, %v1003
  %v1005 = vpop.f32.mrf.mxu0
  %1006 = vdwg.mxu0
  %1007 = vmatpush.bf16.msra.mxu0 %v677
  %1008 = vmatpush.bf16.msra.mxu0 %v673
  %1009 = vmatpush.bf16.msra.mxu0 %v669
  %1010 = vmatpush.bf16.msra.mxu0 %v665
  %1011 = vmatpush.bf16.msra.mxu0 %v661
  %1012 = vmatpush.bf16.msra.mxu0 %v657
  %1013 = vmatpush.bf16.msra.mxu0 %v653
  %1014 = vmatpush.bf16.msra.mxu0 %v649
  %1015 = vmatmul.bf16.gmra.mxu0 %v121
  %v1016 = vpop.f32.mrf.mxu0
  %v1017 = vadd.f32 %v257, %v1016
  %v1018 = vpop.f32.mrf.mxu0
  %1019 = vdwg.mxu0
  %1020 = vmatpush.bf16.msra.mxu0 %v709
  %1021 = vmatpush.bf16.msra.mxu0 %v705
  %1022 = vmatpush.bf16.msra.mxu0 %v701
  %1023 = vmatpush.bf16.msra.mxu0 %v697
  %1024 = vmatpush.bf16.msra.mxu0 %v693
  %1025 = vmatpush.bf16.msra.mxu0 %v689
  %1026 = vmatpush.bf16.msra.mxu0 %v685
  %1027 = vmatpush.bf16.msra.mxu0 %v681
  %1028 = vmatmul.bf16.gmra.mxu0 %v122
  %v1029 = vpop.f32.mrf.mxu0
  %v1030 = vadd.f32 %v1017, %v1029
  %v1031 = vpop.f32.mrf.mxu0
  %1032 = vdwg.mxu0
  %1033 = vmatpush.bf16.msra.mxu0 %v741
  %1034 = vmatpush.bf16.msra.mxu0 %v737
  %1035 = vmatpush.bf16.msra.mxu0 %v733
  %1036 = vmatpush.bf16.msra.mxu0 %v729
  %1037 = vmatpush.bf16.msra.mxu0 %v725
  %1038 = vmatpush.bf16.msra.mxu0 %v721
  %1039 = vmatpush.bf16.msra.mxu0 %v717
  %1040 = vmatpush.bf16.msra.mxu0 %v713
  %1041 = vmatmul.bf16.gmra.mxu0 %v123
  %v1042 = vpop.f32.mrf.mxu0
  %v1043 = vadd.f32 %v1030, %v1042
  %v1044 = vpop.f32.mrf.mxu0
  %1045 = vdwg.mxu0
  %1046 = vmatpush.bf16.msra.mxu0 %v773
  %1047 = vmatpush.bf16.msra.mxu0 %v769
  %1048 = vmatpush.bf16.msra.mxu0 %v765
  %1049 = vmatpush.bf16.msra.mxu0 %v761
  %1050 = vmatpush.bf16.msra.mxu0 %v757
  %1051 = vmatpush.bf16.msra.mxu0 %v753
  %1052 = vmatpush.bf16.msra.mxu0 %v749
  %1053 = vmatpush.bf16.msra.mxu0 %v745
  %1054 = vmatmul.bf16.gmra.mxu0 %v124
  %v1055 = vpop.f32.mrf.mxu0
  %v1056 = vadd.f32 %v1043, %v1055
  %v1057 = vpop.f32.mrf.mxu0
  %1058 = vdwg.mxu0
  %1059 = vmatpush.bf16.msra.mxu0 %v678
  %1060 = vmatpush.bf16.msra.mxu0 %v674
  %1061 = vmatpush.bf16.msra.mxu0 %v670
  %1062 = vmatpush.bf16.msra.mxu0 %v666
  %1063 = vmatpush.bf16.msra.mxu0 %v662
  %1064 = vmatpush.bf16.msra.mxu0 %v658
  %1065 = vmatpush.bf16.msra.mxu0 %v654
  %1066 = vmatpush.bf16.msra.mxu0 %v650
  %1067 = vmatmul.bf16.gmra.mxu0 %v121
  %v1068 = vpop.f32.mrf.mxu0
  %v1069 = vadd.f32 %v258, %v1068
  %v1070 = vpop.f32.mrf.mxu0
  %1071 = vdwg.mxu0
  %1072 = vmatpush.bf16.msra.mxu0 %v710
  %1073 = vmatpush.bf16.msra.mxu0 %v706
  %1074 = vmatpush.bf16.msra.mxu0 %v702
  %1075 = vmatpush.bf16.msra.mxu0 %v698
  %1076 = vmatpush.bf16.msra.mxu0 %v694
  %1077 = vmatpush.bf16.msra.mxu0 %v690
  %1078 = vmatpush.bf16.msra.mxu0 %v686
  %1079 = vmatpush.bf16.msra.mxu0 %v682
  %1080 = vmatmul.bf16.gmra.mxu0 %v122
  %v1081 = vpop.f32.mrf.mxu0
  %v1082 = vadd.f32 %v1069, %v1081
  %v1083 = vpop.f32.mrf.mxu0
  %1084 = vdwg.mxu0
  %1085 = vmatpush.bf16.msra.mxu0 %v742
  %1086 = vmatpush.bf16.msra.mxu0 %v738
  %1087 = vmatpush.bf16.msra.mxu0 %v734
  %1088 = vmatpush.bf16.msra.mxu0 %v730
  %1089 = vmatpush.bf16.msra.mxu0 %v726
  %1090 = vmatpush.bf16.msra.mxu0 %v722
  %1091 = vmatpush.bf16.msra.mxu0 %v718
  %1092 = vmatpush.bf16.msra.mxu0 %v714
  %1093 = vmatmul.bf16.gmra.mxu0 %v123
  %v1094 = vpop.f32.mrf.mxu0
  %v1095 = vadd.f32 %v1082, %v1094
  %v1096 = vpop.f32.mrf.mxu0
  %1097 = vdwg.mxu0
  %1098 = vmatpush.bf16.msra.mxu0 %v774
  %1099 = vmatpush.bf16.msra.mxu0 %v770
  %1100 = vmatpush.bf16.msra.mxu0 %v766
  %1101 = vmatpush.bf16.msra.mxu0 %v762
  %1102 = vmatpush.bf16.msra.mxu0 %v758
  %1103 = vmatpush.bf16.msra.mxu0 %v754
  %1104 = vmatpush.bf16.msra.mxu0 %v750
  %1105 = vmatpush.bf16.msra.mxu0 %v746
  %1106 = vmatmul.bf16.gmra.mxu0 %v124
  %v1107 = vpop.f32.mrf.mxu0
  %v1108 = vadd.f32 %v1095, %v1107
  %v1109 = vpop.f32.mrf.mxu0
  %1110 = vdwg.mxu0
  %v1111 = vmax.f32 %v952, 0.0
  %v1112 = vmax.f32 %v1004, 0.0
  %v1113 = vmax.f32 %v1056, 0.0
  %v1114 = vmax.f32 %v1108, 0.0
  %v1115 = vpack.c.bf16 %v1111, %v1111
  %v1116 = vpack.c.bf16 %v1112, %v1112
  %v1117 = vpack.c.bf16 %v1113, %v1113
  %v1118 = vpack.c.bf16 %v1114, %v1114
  %v1119 = vld [vmem:[%s5] sm:$0xf]
  %v1120 = vld [vmem:[%s5 + $0x4] sm:$0xf]
  %v1121 = vld [vmem:[%s5 + $0x8] sm:$0xf]
  %v1122 = vld [vmem:[%s5 + $0xc] sm:$0xf]
  %v1123 = vld [vmem:[%s5 + $0x10] sm:$0xf]
  %v1124 = vld [vmem:[%s5 + $0x14] sm:$0xf]
  %v1125 = vld [vmem:[%s5 + $0x18] sm:$0xf]
  %v1126 = vld [vmem:[%s5 + $0x1c] sm:$0xf]
  %v1127 = vld [vmem:[%s5 + $0x20] sm:$0xf]
  %v1128 = vld [vmem:[%s5 + $0x24] sm:$0xf]
  %v1129 = vld [vmem:[%s5 + $0x28] sm:$0xf]
  %v1130 = vld [vmem:[%s5 + $0x2c] sm:$0xf]
  %v1131 = vld [vmem:[%s5 + $0x30] sm:$0xf]
  %v1132 = vld [vmem:[%s5 + $0x34] sm:$0xf]
  %v1133 = vld [vmem:[%s5 + $0x38] sm:$0xf]
  %v1134 = vld [vmem:[%s5 + $0x3c] sm:$0xf]
  %v1135 = vld [vmem:[%s5 + $0x40] sm:$0xf]
  %v1136 = vld [vmem:[%s5 + $0x44] sm:$0xf]
  %v1137 = vld [vmem:[%s5 + $0x48] sm:$0xf]
  %v1138 = vld [vmem:[%s5 + $0x4c] sm:$0xf]
  %v1139 = vld [vmem:[%s5 + $0x50] sm:$0xf]
  %v1140 = vld [vmem:[%s5 + $0x54] sm:$0xf]
  %v1141 = vld [vmem:[%s5 + $0x58] sm:$0xf]
  %v1142 = vld [vmem:[%s5 + $0x5c] sm:$0xf]
  %v1143 = vld [vmem:[%s5 + $0x60] sm:$0xf]
  %v1144 = vld [vmem:[%s5 + $0x64] sm:$0xf]
  %v1145 = vld [vmem:[%s5 + $0x68] sm:$0xf]
  %v1146 = vld [vmem:[%s5 + $0x6c] sm:$0xf]
  %v1147 = vld [vmem:[%s5 + $0x70] sm:$0xf]
  %v1148 = vld [vmem:[%s5 + $0x74] sm:$0xf]
  %v1149 = vld [vmem:[%s5 + $0x78] sm:$0xf]
  %v1150 = vld [vmem:[%s5 + $0x7c] sm:$0xf]
  %v1151 = vld [vmem:[%s5 + $0x80] sm:$0xf]
  %v1152 = vld [vmem:[%s5 + $0x84] sm:$0xf]
  %v1153 = vld [vmem:[%s5 + $0x88] sm:$0xf]
  %v1154 = vld [vmem:[%s5 + $0x8c] sm:$0xf]
  %v1155 = vld [vmem:[%s5 + $0x90] sm:$0xf]
  %v1156 = vld [vmem:[%s5 + $0x94] sm:$0xf]
  %v1157 = vld [vmem:[%s5 + $0x98] sm:$0xf]
  %v1158 = vld [vmem:[%s5 + $0x9c] sm:$0xf]
  %v1159 = vld [vmem:[%s5 + $0xa0] sm:$0xf]
  %v1160 = vld [vmem:[%s5 + $0xa4] sm:$0xf]
  %v1161 = vld [vmem:[%s5 + $0xa8] sm:$0xf]
  %v1162 = vld [vmem:[%s5 + $0xac] sm:$0xf]
  %v1163 = vld [vmem:[%s5 + $0xb0] sm:$0xf]
  %v1164 = vld [vmem:[%s5 + $0xb4] sm:$0xf]
  %v1165 = vld [vmem:[%s5 + $0xb8] sm:$0xf]
  %v1166 = vld [vmem:[%s5 + $0xbc] sm:$0xf]
  %v1167 = vld [vmem:[%s5 + $0xc0] sm:$0xf]
  %v1168 = vld [vmem:[%s5 + $0xc4] sm:$0xf]
  %v1169 = vld [vmem:[%s5 + $0xc8] sm:$0xf]
  %v1170 = vld [vmem:[%s5 + $0xcc] sm:$0xf]
  %v1171 = vld [vmem:[%s5 + $0xd0] sm:$0xf]
  %v1172 = vld [vmem:[%s5 + $0xd4] sm:$0xf]
  %v1173 = vld [vmem:[%s5 + $0xd8] sm:$0xf]
  %v1174 = vld [vmem:[%s5 + $0xdc] sm:$0xf]
  %v1175 = vld [vmem:[%s5 + $0xe0] sm:$0xf]
  %v1176 = vld [vmem:[%s5 + $0xe4] sm:$0xf]
  %v1177 = vld [vmem:[%s5 + $0xe8] sm:$0xf]
  %v1178 = vld [vmem:[%s5 + $0xec] sm:$0xf]
  %v1179 = vld [vmem:[%s5 + $0xf0] sm:$0xf]
  %v1180 = vld [vmem:[%s5 + $0xf4] sm:$0xf]
  %v1181 = vld [vmem:[%s5 + $0xf8] sm:$0xf]
  %v1182 = vld [vmem:[%s5 + $0xfc] sm:$0xf]
  %v1247 = vunpack.c.l.b16 %v1119
  %v1248 = vunpack.c.l.b16 %v1120
  %v1249 = vunpack.c.l.b16 %v1121
  %v1250 = vunpack.c.l.b16 %v1122
  %v1251 = vunpack.c.l.b16 %v1123
  %v1252 = vunpack.c.l.b16 %v1124
  %v1253 = vunpack.c.l.b16 %v1125
  %v1254 = vunpack.c.l.b16 %v1126
  %v1255 = vunpack.c.l.b16 %v1127
  %v1256 = vunpack.c.l.b16 %v1128
  %v1257 = vunpack.c.l.b16 %v1129
  %v1258 = vunpack.c.l.b16 %v1130
  %v1259 = vunpack.c.l.b16 %v1131
  %v1260 = vunpack.c.l.b16 %v1132
  %v1261 = vunpack.c.l.b16 %v1133
  %v1262 = vunpack.c.l.b16 %v1134
  %v1263 = vunpack.c.l.b16 %v1135
  %v1264 = vunpack.c.l.b16 %v1136
  %v1265 = vunpack.c.l.b16 %v1137
  %v1266 = vunpack.c.l.b16 %v1138
  %v1267 = vunpack.c.l.b16 %v1139
  %v1268 = vunpack.c.l.b16 %v1140
  %v1269 = vunpack.c.l.b16 %v1141
  %v1270 = vunpack.c.l.b16 %v1142
  %v1271 = vunpack.c.l.b16 %v1143
  %v1272 = vunpack.c.l.b16 %v1144
  %v1273 = vunpack.c.l.b16 %v1145
  %v1274 = vunpack.c.l.b16 %v1146
  %v1275 = vunpack.c.l.b16 %v1147
  %v1276 = vunpack.c.l.b16 %v1148
  %v1277 = vunpack.c.l.b16 %v1149
  %v1278 = vunpack.c.l.b16 %v1150
  %v1279 = vunpack.c.l.b16 %v1151
  %v1280 = vunpack.c.l.b16 %v1152
  %v1281 = vunpack.c.l.b16 %v1153
  %v1282 = vunpack.c.l.b16 %v1154
  %v1283 = vunpack.c.l.b16 %v1155
  %v1284 = vunpack.c.l.b16 %v1156
  %v1285 = vunpack.c.l.b16 %v1157
  %v1286 = vunpack.c.l.b16 %v1158
  %v1287 = vunpack.c.l.b16 %v1159
  %v1288 = vunpack.c.l.b16 %v1160
  %v1289 = vunpack.c.l.b16 %v1161
  %v1290 = vunpack.c.l.b16 %v1162
  %v1291 = vunpack.c.l.b16 %v1163
  %v1292 = vunpack.c.l.b16 %v1164
  %v1293 = vunpack.c.l.b16 %v1165
  %v1294 = vunpack.c.l.b16 %v1166
  %v1295 = vunpack.c.l.b16 %v1167
  %v1296 = vunpack.c.l.b16 %v1168
  %v1297 = vunpack.c.l.b16 %v1169
  %v1298 = vunpack.c.l.b16 %v1170
  %v1299 = vunpack.c.l.b16 %v1171
  %v1300 = vunpack.c.l.b16 %v1172
  %v1301 = vunpack.c.l.b16 %v1173
  %v1302 = vunpack.c.l.b16 %v1174
  %v1303 = vunpack.c.l.b16 %v1175
  %v1304 = vunpack.c.l.b16 %v1176
  %v1305 = vunpack.c.l.b16 %v1177
  %v1306 = vunpack.c.l.b16 %v1178
  %v1307 = vunpack.c.l.b16 %v1179
  %v1308 = vunpack.c.l.b16 %v1180
  %v1309 = vunpack.c.l.b16 %v1181
  %v1310 = vunpack.c.l.b16 %v1182
  %v1311 = vpack.c.b16 %v1248, %v1247
  %v1312 = vpack.c.b16 %v1250, %v1249
  %v1313 = vpack.c.b16 %v1252, %v1251
  %v1314 = vpack.c.b16 %v1254, %v1253
  %v1315 = vpack.c.b16 %v1256, %v1255
  %v1316 = vpack.c.b16 %v1258, %v1257
  %v1317 = vpack.c.b16 %v1260, %v1259
  %v1318 = vpack.c.b16 %v1262, %v1261
  %v1319 = vpack.c.b16 %v1264, %v1263
  %v1320 = vpack.c.b16 %v1266, %v1265
  %v1321 = vpack.c.b16 %v1268, %v1267
  %v1322 = vpack.c.b16 %v1270, %v1269
  %v1323 = vpack.c.b16 %v1272, %v1271
  %v1324 = vpack.c.b16 %v1274, %v1273
  %v1325 = vpack.c.b16 %v1276, %v1275
  %v1326 = vpack.c.b16 %v1278, %v1277
  %v1327 = vpack.c.b16 %v1280, %v1279
  %v1328 = vpack.c.b16 %v1282, %v1281
  %v1329 = vpack.c.b16 %v1284, %v1283
  %v1330 = vpack.c.b16 %v1286, %v1285
  %v1331 = vpack.c.b16 %v1288, %v1287
  %v1332 = vpack.c.b16 %v1290, %v1289
  %v1333 = vpack.c.b16 %v1292, %v1291
  %v1334 = vpack.c.b16 %v1294, %v1293
  %v1335 = vpack.c.b16 %v1296, %v1295
  %v1336 = vpack.c.b16 %v1298, %v1297
  %v1337 = vpack.c.b16 %v1300, %v1299
  %v1338 = vpack.c.b16 %v1302, %v1301
  %v1339 = vpack.c.b16 %v1304, %v1303
  %v1340 = vpack.c.b16 %v1306, %v1305
  %v1341 = vpack.c.b16 %v1308, %v1307
  %v1342 = vpack.c.b16 %v1310, %v1309
  %1375 = vmatpush.bf16.msra.mxu0 %v1318
  %1376 = vmatpush.bf16.msra.mxu0 %v1317
  %1377 = vmatpush.bf16.msra.mxu0 %v1316
  %1378 = vmatpush.bf16.msra.mxu0 %v1315
  %1379 = vmatpush.bf16.msra.mxu0 %v1314
  %1380 = vmatpush.bf16.msra.mxu0 %v1313
  %1381 = vmatpush.bf16.msra.mxu0 %v1312
  %1382 = vmatpush.bf16.msra.mxu0 %v1311
  %1383 = vmatmul.bf16.gmra.mxu0 %v1115
  %v1384 = vpop.f32.mrf.mxu0
  %v1385 = vadd.f32 0.0, %v1384
  %v1386 = vpop.f32.mrf.mxu0
  %1387 = vdwg.mxu0
  %1388 = vmatpush.bf16.msra.mxu0 %v1326
  %1389 = vmatpush.bf16.msra.mxu0 %v1325
  %1390 = vmatpush.bf16.msra.mxu0 %v1324
  %1391 = vmatpush.bf16.msra.mxu0 %v1323
  %1392 = vmatpush.bf16.msra.mxu0 %v1322
  %1393 = vmatpush.bf16.msra.mxu0 %v1321
  %1394 = vmatpush.bf16.msra.mxu0 %v1320
  %1395 = vmatpush.bf16.msra.mxu0 %v1319
  %1396 = vmatmul.bf16.gmra.mxu0 %v1116
  %v1397 = vpop.f32.mrf.mxu0
  %v1398 = vadd.f32 %v1385, %v1397
  %v1399 = vpop.f32.mrf.mxu0
  %1400 = vdwg.mxu0
  %1401 = vmatpush.bf16.msra.mxu0 %v1334
  %1402 = vmatpush.bf16.msra.mxu0 %v1333
  %1403 = vmatpush.bf16.msra.mxu0 %v1332
  %1404 = vmatpush.bf16.msra.mxu0 %v1331
  %1405 = vmatpush.bf16.msra.mxu0 %v1330
  %1406 = vmatpush.bf16.msra.mxu0 %v1329
  %1407 = vmatpush.bf16.msra.mxu0 %v1328
  %1408 = vmatpush.bf16.msra.mxu0 %v1327
  %1409 = vmatmul.bf16.gmra.mxu0 %v1117
  %v1410 = vpop.f32.mrf.mxu0
  %v1411 = vadd.f32 %v1398, %v1410
  %v1412 = vpop.f32.mrf.mxu0
  %1413 = vdwg.mxu0
  %1414 = vmatpush.bf16.msra.mxu0 %v1342
  %1415 = vmatpush.bf16.msra.mxu0 %v1341
  %1416 = vmatpush.bf16.msra.mxu0 %v1340
  %1417 = vmatpush.bf16.msra.mxu0 %v1339
  %1418 = vmatpush.bf16.msra.mxu0 %v1338
  %1419 = vmatpush.bf16.msra.mxu0 %v1337
  %1420 = vmatpush.bf16.msra.mxu0 %v1336
  %1421 = vmatpush.bf16.msra.mxu0 %v1335
  %1422 = vmatmul.bf16.gmra.mxu0 %v1118
  %v1423 = vpop.f32.mrf.mxu0
  %v1424 = vadd.f32 %v1411, %v1423
  %v1425 = vpop.f32.mrf.mxu0
  %1426 = vdwg.mxu0
  %1427 = vst [vmem:[%s6] sm:$0xff] %v1424
  // Predicated region
  $region26: #{neural_network_forward.1} parent=0 // pred_check
    _
  $region27: #{neural_network_forward.1} parent=0 // pred_check_branch
    %1429 = sbr.rel (0) target = $region29
  $region28: #{neural_network_forward.1} parent=0 // pred_region
    _
  $region29: #{neural_network_forward.1} parent=0 // pred_fallthru
    _
  // Predicated region
  $region30: #{neural_network_forward.1} parent=0 // pred_check
    _
  $region31: #{neural_network_forward.1} parent=0 // pred_check_branch
    %1431 = sbr.rel (0) target = $region33
  $region32: #{neural_network_forward.1} parent=0 // pred_region
    _
  $region33: #{neural_network_forward.1} parent=0 // pred_fallthru
    _

</llo_original>
